<compile_context>
chip_gen: v6e
topology: v6e:2x2x1
jax: 0.10.0
libtpu: 0.0.40
codegen_flags: <defaults>
</compile_context>

<pallas_src>
import math
import functools

import jax
import jax.numpy as jnp
from jax import lax
from jax.experimental import pallas as pl
from jax.experimental.pallas import tpu as pltpu


# ----------------------------------------------------------------------------
# Per-generation tiling / VMEM budget
# ----------------------------------------------------------------------------
def _device_vmem_capacity_bytes():
    """Trace-time VMEM capacity query; falls back to the smallest (v7x, 64 MiB)."""
    try:
        info = pltpu.get_tpu_info()
        for attr in ("vmem_capacity_bytes", "vmem_bytes"):
            val = getattr(info, attr, None)
            if val:
                return int(val)
    except Exception:
        pass
    return 64 * 1024 * 1024


_VMEM_CAP = _device_vmem_capacity_bytes()
# Leave ~20% headroom below physical VMEM for compiler scratch + pipeline buffers
# (never request 100% of v7x's 64 MiB).
_VMEM_LIMIT = min(int(_VMEM_CAP * 0.8), 112 * 1024 * 1024)
_BIG_VMEM = _VMEM_CAP >= 96 * 1024 * 1024        # v5e/v6e (128 MiB) vs v7x (64 MiB)

# Linear-projection tiles: large on 128 MiB parts (more x/w reuse, fewer grid
# steps, closer to HBM roofline), conservative under v7x's 64 MiB.  tn/tk are
# 256-multiples so each pass fills a 256x256 MXU on v6e/v7x.
_LIN_TM, _LIN_TN, _LIN_TK = (512, 512, 1024) if _BIG_VMEM else (256, 256, 512)
# Attention tiles: Q block resident across the Lk axis; a large Lk tile
# amortizes the per-head fixed VPU/EUP work and halves grid-step count.
_ATTN_TQ, _ATTN_TK = 256, 512


def _pick_tile(dim, preferred, align):
    """Largest divisor of `dim` that is <= `preferred` and a multiple of
    `align`; falls back to the full dim (a full-extent block is always legal)."""
    if dim <= preferred:
        return dim
    t = (preferred // align) * align
    while t >= align:
        if dim % t == 0:
            return t
        t -= align
    # TODO(synk): no aligned divisor -> full-dim fallback disables pipelining for
    # large awkward lengths; pad/mask upstream if that ever matters.
    return dim


# ----------------------------------------------------------------------------
# Fused multi-output linear:  x @ [W1, ..., Wn] + [b1, ..., bn]
# ----------------------------------------------------------------------------
def _multi_linear_kernel(*refs, n_out):
    x_ref = refs[0]
    w_refs = refs[1:1 + n_out]
    b_refs = refs[1 + n_out:1 + 2 * n_out]
    o_refs = refs[1 + 2 * n_out:1 + 3 * n_out]
    acc_refs = refs[1 + 3 * n_out:1 + 4 * n_out]
    k = pl.program_id(2)

    @pl.when(k == 0)
    def _init():
        for acc in acc_refs:
            acc[...] = jnp.zeros_like(acc)

    x = x_ref[...]                                   # one x load, reused n_out times
    for w, acc in zip(w_refs, acc_refs):
        acc[...] += jnp.dot(x, w[...], preferred_element_type=jnp.float32)

    @pl.when(k == pl.num_programs(2) - 1)
    def _finalize():
        for b, o, acc in zip(b_refs, o_refs, acc_refs):
            o[...] = (acc[...] + b[...].astype(jnp.float32)).astype(o.dtype)


def multi_linear_pallas(x2d, weights, biases):
    """x2d: (M, K); weights: list of (K, N); biases: list of (N,).
    Returns a list of (M, N) outputs.  The x tile is DMA'd from HBM once per
    grid step and reused across all outputs (fused Q/K/V projections)."""
    M, K = x2d.shape
    N = weights[0].shape[1]
    n_out = len(weights)
    tm = _pick_tile(M, _LIN_TM, 8)
    tn = _pick_tile(N, _LIN_TN, 128)
    tk = _pick_tile(K, _LIN_TK, 128)
    grid = (M // tm, N // tn, K // tk)

    x_spec = pl.BlockSpec((tm, tk), lambda i, j, k: (i, k))
    w_spec = pl.BlockSpec((tk, tn), lambda i, j, k: (k, j))
    b_spec = pl.BlockSpec((1, tn), lambda i, j, k: (0, j))
    o_spec = pl.BlockSpec((tm, tn), lambda i, j, k: (i, j))

    outs = pl.pallas_call(
        functools.partial(_multi_linear_kernel, n_out=n_out),
        out_shape=[jax.ShapeDtypeStruct((M, N), x2d.dtype) for _ in range(n_out)],
        grid=grid,
        in_specs=[x_spec] + [w_spec] * n_out + [b_spec] * n_out,
        out_specs=[o_spec] * n_out,
        scratch_shapes=[pltpu.VMEM((tm, tn), jnp.float32) for _ in range(n_out)],
        compiler_params=pltpu.CompilerParams(
            dimension_semantics=("parallel", "parallel", "arbitrary"),
            vmem_limit_bytes=_VMEM_LIMIT),
    )(x2d, *weights, *[b.reshape(1, N) for b in biases])
    if not isinstance(outs, (list, tuple)):
        outs = (outs,)
    return list(outs)


# ----------------------------------------------------------------------------
# Flash-style attention kernel (online softmax, heads sliced in-kernel)
# ----------------------------------------------------------------------------
def _mha_flash_kernel(*refs, num_heads, d_head, has_bias, has_pad):
    n_in = 3 + int(has_bias) + int(has_pad)
    q_ref, k_ref, v_ref = refs[0], refs[1], refs[2]
    bias_ref = refs[3] if has_bias else None
    pad_ref = refs[3 + int(has_bias)] if has_pad else None
    o_ref = refs[n_in]
    m_ref, l_ref, acc_ref = refs[n_in + 1], refs[n_in + 2], refs[n_in + 3]

    ki = pl.program_id(2)

    @pl.when(ki == 0)
    def _init():
        m_ref[...] = jnp.full_like(m_ref, -jnp.inf)
        l_ref[...] = jnp.zeros_like(l_ref)
        acc_ref[...] = jnp.zeros_like(acc_ref)

    # Head-invariant additive bias for this (b, qi, ki) tile.
    bias = None
    if has_bias:
        bias = bias_ref[...].astype(jnp.float32)          # (tq, tk)
    elif has_pad:
        bias = pad_ref[...].astype(jnp.float32)           # (1, tk), broadcasts

    tq = q_ref.shape[0]
    alphas = []
    pvs = []
    # Per-head online softmax.  The temporaries that survive the loop (alpha
    # and P@V per head) together form exactly one (tq, D) tile, which is then
    # applied to the accumulator in a single lane-dense read-modify-write.
    for h in range(num_heads):
        sl = slice(h * d_head, (h + 1) * d_head)
        q_h = q_ref[:, sl]                                # 1/sqrt(d) folded into w_q
        k_h = k_ref[:, sl]
        # Contract last dims of both operands: no k.T materialized.
        s = lax.dot_general(q_h, k_h, (((1,), (1,)), ((), ())),
                            preferred_element_type=jnp.float32)
        if bias is not None:
            s = s + bias
        m_prev = m_ref[h]                                 # (tq, 1)
        m_new = jnp.maximum(m_prev, jnp.max(s, axis=-1, keepdims=True))
        alpha = jnp.exp(m_prev - m_new)
        p = jnp.exp(s - m_new)
        l_ref[h] = alpha * l_ref[h] + jnp.sum(p, axis=-1, keepdims=True)
        m_ref[h] = m_new
        pvs.append(jnp.dot(p.astype(v_ref.dtype), v_ref[:, sl],
                           preferred_element_type=jnp.float32))
        alphas.append(jnp.broadcast_to(alpha, (tq, d_head)))

    # One full-width (tq, D) accumulator update per Lk step instead of
    # num_heads masked partial-lane RMWs.
    acc_ref[...] = (acc_ref[...] * jnp.concatenate(alphas, axis=-1)
                    + jnp.concatenate(pvs, axis=-1))

    @pl.when(ki == pl.num_programs(2) - 1)
    def _finalize():
        inv = 1.0 / l_ref[...]                            # exact reciprocal (f32)
        inv_full = jnp.concatenate(
            [jnp.broadcast_to(inv[h], (tq, d_head)) for h in range(num_heads)],
            axis=-1)
        # Single lane-dense, unmasked (tq, D) output store.
        o_ref[...] = (acc_ref[...] * inv_full).astype(o_ref.dtype)


def attention_pallas(q_src, k_src, v_src, dense_bias, pad_bias, *,
                     num_heads, d_head, out_dtype):
    """q_src: (B, Lq, D); k_src/v_src: (B, Lk, D); dense_bias: (B, Lq, Lk) or
    None; pad_bias: (B, Lk) or None (mutually exclusive).  Returns (B, Lq, D)."""
    B, Lq, D = q_src.shape
    Lk = k_src.shape[1]
    assert num_heads * d_head == D
    has_bias = dense_bias is not None
    has_pad = pad_bias is not None
    assert not (has_bias and has_pad)

    tq = _pick_tile(Lq, _ATTN_TQ, 8)
    # v7x has two TensorCores: keep >= 2 steps on the parallel axes so both
    # get work (shrink tq rather than idling a core).
    if B * (Lq // tq) < 2 and Lq % 16 == 0:
        tq = Lq // 2
    # Bias blocks put tk on the lane axis -> 128 alignment (or full Lk).
    tk = _pick_tile(Lk, _ATTN_TK, 128 if (has_bias or has_pad) else 8)
    grid = (B, Lq // tq, Lk // tk)

    in_specs = [
        # Q rows: resident across the Lk axis (index does not depend on ki).
        pl.BlockSpec((None, tq, D), lambda b, qi, ki: (b, qi, 0)),
        # K / V rows: streamed along the reduction axis, D-wide only.
        pl.BlockSpec((None, tk, D), lambda b, qi, ki: (b, ki, 0)),
        pl.BlockSpec((None, tk, D), lambda b, qi, ki: (b, ki, 0)),
    ]
    args = [q_src, k_src, v_src]
    if has_bias:
        in_specs.append(pl.BlockSpec((None, tq, tk), lambda b, qi, ki: (b, qi, ki)))
        args.append(dense_bias)
    if has_pad:
        in_specs.append(pl.BlockSpec((1, tk), lambda b, qi, ki: (b, ki)))
        args.append(pad_bias)

    kernel = functools.partial(
        _mha_flash_kernel, num_heads=num_heads, d_head=d_head,
        has_bias=has_bias, has_pad=has_pad)
    return pl.pallas_call(
        kernel,
        out_shape=jax.ShapeDtypeStruct((B, Lq, D), out_dtype),
        grid=grid,
        in_specs=in_specs,
        out_specs=pl.BlockSpec((None, tq, D), lambda b, qi, ki: (b, qi, 0)),
        scratch_shapes=[
            pltpu.VMEM((num_heads, tq, 1), jnp.float32),   # running max m
            pltpu.VMEM((num_heads, tq, 1), jnp.float32),   # running denom l
            pltpu.VMEM((tq, D), jnp.float32),              # unnormalized acc
        ],
        compiler_params=pltpu.CompilerParams(
            dimension_semantics=("parallel", "parallel", "arbitrary"),
            vmem_limit_bytes=_VMEM_LIMIT),
    )(*args)


# ----------------------------------------------------------------------------
# Mask preprocessing (mirrors the PyTorch masking semantics, head-invariant)
# ----------------------------------------------------------------------------
def prepare_masks(mask, key_padding_mask, bsz, q_len, k_len, dtype):
    """Returns (dense_bias | None, pad_bias | None).  A dense (B, Lq, Lk) bias
    is only materialized when an explicit `mask` is supplied; a padding-only
    mask stays a thin (B, Lk) vector that the kernel broadcasts in-place."""
    neg = jnp.asarray(-10000.0, dtype)
    zero = jnp.asarray(0.0, dtype)

    pad = None
    if key_padding_mask is not None:
        if key_padding_mask.dtype == jnp.bool_:
            pad = jnp.where(key_padding_mask, neg, zero)
        else:
            pad = key_padding_mask.astype(dtype)
        full_pad = jnp.all(pad == neg, axis=-1, keepdims=True)
        pad = jnp.where(full_pad, zero, pad)               # (B, Lk)

    if mask is None:
        return None, pad

    if mask.dtype == jnp.bool_:
        mask = jnp.where(mask, neg, zero)
    mask = mask.astype(dtype)
    full_masked = jnp.all(mask == neg, axis=-1, keepdims=True)
    mask = jnp.where(full_masked, zero, mask)
    if mask.ndim == 2:
        mask = mask[None, :, :]
    dense = jnp.broadcast_to(mask, (bsz, q_len, k_len))
    if pad is not None:
        # The reference module merges the two masks with torch.minimum.
        dense = jnp.minimum(
            dense, jnp.broadcast_to(pad[:, None, :], (bsz, q_len, k_len)))
    return dense.astype(dtype), None


# ----------------------------------------------------------------------------
# Module wrapper
# ----------------------------------------------------------------------------
class MultiHeadAttentionPallas:
    def __init__(self, d_model, num_heads, dropout, key):
        assert d_model % num_heads == 0
        self.d_model = d_model
        self.num_heads = num_heads
        self.d_head = d_model // num_heads
        self.dropout_p = dropout     # TODO(synk): eval path only (p = 0).
        bound = 1.0 / math.sqrt(d_model)
        ks = jax.random.split(key, 8)

        def u(kk, shape):
            return jax.random.uniform(kk, shape, jnp.float32, -bound, bound)

        # Stored as (Din, Dout) == torch weight transposed.
        self.wq, self.bq = u(ks[0], (d_model, d_model)), u(ks[1], (d_model,))
        self.wk, self.bk = u(ks[2], (d_model, d_model)), u(ks[3], (d_model,))
        self.wv, self.bv = u(ks[4], (d_model, d_model)), u(ks[5], (d_model,))
        self.wo, self.bo = u(ks[6], (d_model, d_model)), u(ks[7], (d_model,))
        # Softmax 1/sqrt(d_head) folded into the Q projection (kernel path).
        scale = 1.0 / math.sqrt(self.d_head)
        self.wq_s = self.wq * scale
        self.bq_s = self.bq * scale

    def __call__(self, q, k, v, mask=None, key_padding_mask=None):
        B, Lq, D = q.shape
        Lk = k.shape[1]
        H, Dh = self.num_heads, self.d_head

        # Projections.  Fused variants read the activation once per tile but
        # emit SEPARATE Q/K/V arrays so attention never streams unused columns
        # and no host-side concat/split copies hit HBM.
        if q is k and k is v:
            qp, kp, vp = multi_linear_pallas(
                q.reshape(B * Lq, D),
                [self.wq_s, self.wk, self.wv],
                [self.bq_s, self.bk, self.bv])
        else:
            qp = multi_linear_pallas(q.reshape(B * Lq, D),
                                     [self.wq_s], [self.bq_s])[0]
            if k is v:
                kp, vp = multi_linear_pallas(
                    k.reshape(B * Lk, D), [self.wk, self.wv], [self.bk, self.bv])
            else:
                kp = multi_linear_pallas(k.reshape(B * Lk, D),
                                         [self.wk], [self.bk])[0]
                vp = multi_linear_pallas(v.reshape(B * Lk, D),
                                         [self.wv], [self.bv])[0]

        dense_bias, pad_bias = prepare_masks(mask, key_padding_mask,
                                             B, Lq, Lk, q.dtype)
        ctx = attention_pallas(
            qp.reshape(B, Lq, D), kp.reshape(B, Lk, D), vp.reshape(B, Lk, D),
            dense_bias, pad_bias, num_heads=H, d_head=Dh, out_dtype=q.dtype)
        out = multi_linear_pallas(ctx.reshape(B * Lq, D), [self.wo], [self.bo])[0]
        return out.reshape(B, Lq, D)

    # Pure-JAX reference (for correctness check only)
    def reference(self, q, k, v, mask=None, key_padding_mask=None):
        B, Lq, D = q.shape
        Lk = k.shape[1]
        H, Dh = self.num_heads, self.d_head
        qp = (q.reshape(B * Lq, D) @ self.wq + self.bq).reshape(B, Lq, H, Dh).transpose(0, 2, 1, 3)
        kp = (k.reshape(B * Lk, D) @ self.wk + self.bk).reshape(B, Lk, H, Dh).transpose(0, 2, 1, 3)
        vp = (v.reshape(B * Lk, D) @ self.wv + self.bv).reshape(B, Lk, H, Dh).transpose(0, 2, 1, 3)
        dense, pad = prepare_masks(mask, key_padding_mask, B, Lq, Lk, jnp.float32)
        if dense is not None:
            bias = dense
        elif pad is not None:
            bias = jnp.broadcast_to(pad[:, None, :], (B, Lq, Lk))
        else:
            bias = jnp.zeros((B, Lq, Lk), jnp.float32)
        s = jnp.einsum("bhqd,bhkd->bhqk", qp, kp) / math.sqrt(Dh) + bias[:, None, :, :]
        p = jax.nn.softmax(s, axis=-1)
        o = jnp.einsum("bhqk,bhkd->bhqd", p, vp)
        o = o.transpose(0, 2, 1, 3).reshape(B, Lq, D)
        return o @ self.wo + self.bo


if __name__ == "__main__":
    B, L, d_model, num_heads = 2, 8, 32, 4
    key = jax.random.PRNGKey(0)
    k_mod, k_x, k_q, k_k, k_v = jax.random.split(key, 5)

    mha = MultiHeadAttentionPallas(d_model, num_heads, dropout=0.1, key=k_mod)

    # Additive float mask (B, Lq, Lk): mask out the upper triangle (causal-ish).
    mask = jnp.where(jnp.triu(jnp.ones((L, L), bool), k=1), -10000.0, 0.0)
    mask = jnp.broadcast_to(mask, (B, L, L)).astype(jnp.float32)
    # Boolean key padding mask: last two keys of batch 1 are padding.
    key_padding_mask = jnp.zeros((B, L), bool).at[1, -2:].set(True)

    x = jax.random.normal(k_x, (B, L, d_model), jnp.float32)
    q = jax.random.normal(k_q, (B, L, d_model), jnp.float32)
    mem = jax.random.normal(k_k, (B, L, d_model), jnp.float32)
    v = jax.random.normal(k_v, (B, L, d_model), jnp.float32)

    # Tolerance covers default-precision MXU matmuls (bf16 passes for f32 inputs).
    tol = dict(atol=1e-2, rtol=1e-2)

    cases = [
        ("self-attn, float mask + bool padding (dense-bias path)",
         (x, x, x), dict(mask=mask, key_padding_mask=key_padding_mask)),
        ("self-attn, padding only (thin (B,Lk) bias path)",
         (x, x, x), dict(key_padding_mask=key_padding_mask)),
        ("self-attn, no masks (no-bias path)",
         (x, x, x), dict()),
        ("cross-attn, k is v (fused KV projection)",
         (q, mem, mem), dict(mask=mask, key_padding_mask=key_padding_mask)),
        ("cross-attn, distinct q/k/v (separate projections)",
         (q, mem, v), dict(mask=mask, key_padding_mask=key_padding_mask)),
    ]
    for name, args, kw in cases:
        out = jax.block_until_ready(mha(*args, **kw))
        ref = mha.reference(*args, **kw)
        assert out.shape == (B, L, d_model), name
        assert jnp.allclose(out, ref, **tol), f"mismatch vs reference: {name}"

    print("KERNEL_OK")
</pallas_src>

<mosaic_0001>
module attributes {stable_mosaic.version = 11 : i64} {
  func.func @_multi_linear_kernel(%arg0: i32, %arg1: i32, %arg2: i32, %arg3: memref<16x32xf32, #tpu.memory_space<vmem>>, %arg4: memref<32x32xf32, #tpu.memory_space<vmem>>, %arg5: memref<32x32xf32, #tpu.memory_space<vmem>>, %arg6: memref<32x32xf32, #tpu.memory_space<vmem>>, %arg7: memref<1x32xf32, #tpu.memory_space<vmem>>, %arg8: memref<1x32xf32, #tpu.memory_space<vmem>>, %arg9: memref<1x32xf32, #tpu.memory_space<vmem>>, %arg10: memref<16x32xf32, #tpu.memory_space<vmem>>, %arg11: memref<16x32xf32, #tpu.memory_space<vmem>>, %arg12: memref<16x32xf32, #tpu.memory_space<vmem>>, %arg13: memref<16x32xf32, #tpu.memory_space<vmem>>, %arg14: memref<16x32xf32, #tpu.memory_space<vmem>>, %arg15: memref<16x32xf32, #tpu.memory_space<vmem>>) attributes {dimension_semantics = [#tpu.dimension_semantics<parallel>, #tpu.dimension_semantics<parallel>, #tpu.dimension_semantics<arbitrary>], iteration_bounds = array<i64: 1, 1, 1>, scalar_prefetch = 0 : i64, scratch_operands = 3 : i64, tpu.core_type = #tpu.core_type<tc>, window_params = [{transform_indices = @transform_0, window_bounds = array<i64: 16, 32>}, {transform_indices = @transform_1, window_bounds = array<i64: 32, 32>}, {transform_indices = @transform_2, window_bounds = array<i64: 32, 32>}, {transform_indices = @transform_3, window_bounds = array<i64: 32, 32>}, {transform_indices = @transform_4, window_bounds = array<i64: 1, 32>}, {transform_indices = @transform_5, window_bounds = array<i64: 1, 32>}, {transform_indices = @transform_6, window_bounds = array<i64: 1, 32>}, {transform_indices = @transform_7, window_bounds = array<i64: 16, 32>}, {transform_indices = @transform_8, window_bounds = array<i64: 16, 32>}, {transform_indices = @transform_9, window_bounds = array<i64: 16, 32>}]} {
    %c0_i32 = arith.constant 0 : i32
    %0 = arith.cmpi eq, %arg2, %c0_i32 : i32
    %1 = arith.extui %0 : i1 to i32
    %c0_i32_0 = arith.constant 0 : i32
    %2 = arith.cmpi ne, %1, %c0_i32_0 : i32
    scf.if %2 {
      %cst_24 = arith.constant 0.000000e+00 : f32
      %22 = vector.broadcast %cst_24 : f32 to vector<16x32xf32>
      %c0_25 = arith.constant 0 : index
      %c0_26 = arith.constant 0 : index
      %23 = vector.load %arg13[%c0_25, %c0_26] : memref<16x32xf32, #tpu.memory_space<vmem>>, vector<16x32xf32>
      tpu.vector_store %arg13[%c0_25, %c0_26], %22 {strides = array<i32>} : memref<16x32xf32, #tpu.memory_space<vmem>>, vector<16x32xf32>,
      %cst_27 = arith.constant 0.000000e+00 : f32
      %24 = vector.broadcast %cst_27 : f32 to vector<16x32xf32>
      %c0_28 = arith.constant 0 : index
      %c0_29 = arith.constant 0 : index
      %25 = vector.load %arg14[%c0_28, %c0_29] : memref<16x32xf32, #tpu.memory_space<vmem>>, vector<16x32xf32>
      tpu.vector_store %arg14[%c0_28, %c0_29], %24 {strides = array<i32>} : memref<16x32xf32, #tpu.memory_space<vmem>>, vector<16x32xf32>,
      %cst_30 = arith.constant 0.000000e+00 : f32
      %26 = vector.broadcast %cst_30 : f32 to vector<16x32xf32>
      %c0_31 = arith.constant 0 : index
      %c0_32 = arith.constant 0 : index
      %27 = vector.load %arg15[%c0_31, %c0_32] : memref<16x32xf32, #tpu.memory_space<vmem>>, vector<16x32xf32>
      tpu.vector_store %arg15[%c0_31, %c0_32], %26 {strides = array<i32>} : memref<16x32xf32, #tpu.memory_space<vmem>>, vector<16x32xf32>,
    } else {
    }
    %c0 = arith.constant 0 : index
    %c0_1 = arith.constant 0 : index
    %3 = vector.load %arg3[%c0, %c0_1] : memref<16x32xf32, #tpu.memory_space<vmem>>, vector<16x32xf32>
    %c0_2 = arith.constant 0 : index
    %c0_3 = arith.constant 0 : index
    %4 = vector.load %arg13[%c0_2, %c0_3] : memref<16x32xf32, #tpu.memory_space<vmem>>, vector<16x32xf32>
    %c0_4 = arith.constant 0 : index
    %c0_5 = arith.constant 0 : index
    %5 = vector.load %arg4[%c0_4, %c0_5] : memref<32x32xf32, #tpu.memory_space<vmem>>, vector<32x32xf32>
    %cst = arith.constant dense<0.000000e+00> : vector<16x32xf32>
    %6 = tpu.matmul %3, %5, %cst {dimension_numbers = #tpu.dot_dimension_numbers<[1], [0], [0], [1], [0, 0, 1, 1], [], []>} : vector<16x32xf32>, vector<32x32xf32>, vector<16x32xf32> -> vector<16x32xf32>
    %7 = arith.addf %4, %6 : vector<16x32xf32>
    %c0_6 = arith.constant 0 : index
    %c0_7 = arith.constant 0 : index
    %8 = vector.load %arg13[%c0_6, %c0_7] : memref<16x32xf32, #tpu.memory_space<vmem>>, vector<16x32xf32>
    tpu.vector_store %arg13[%c0_6, %c0_7], %7 {strides = array<i32>} : memref<16x32xf32, #tpu.memory_space<vmem>>, vector<16x32xf32>,
    %c0_8 = arith.constant 0 : index
    %c0_9 = arith.constant 0 : index
    %9 = vector.load %arg14[%c0_8, %c0_9] : memref<16x32xf32, #tpu.memory_space<vmem>>, vector<16x32xf32>
    %c0_10 = arith.constant 0 : index
    %c0_11 = arith.constant 0 : index
    %10 = vector.load %arg5[%c0_10, %c0_11] : memref<32x32xf32, #tpu.memory_space<vmem>>, vector<32x32xf32>
    %cst_12 = arith.constant dense<0.000000e+00> : vector<16x32xf32>
    %11 = tpu.matmul %3, %10, %cst_12 {dimension_numbers = #tpu.dot_dimension_numbers<[1], [0], [0], [1], [0, 0, 1, 1], [], []>} : vector<16x32xf32>, vector<32x32xf32>, vector<16x32xf32> -> vector<16x32xf32>
    %12 = arith.addf %9, %11 : vector<16x32xf32>
    %c0_13 = arith.constant 0 : index
    %c0_14 = arith.constant 0 : index
    %13 = vector.load %arg14[%c0_13, %c0_14] : memref<16x32xf32, #tpu.memory_space<vmem>>, vector<16x32xf32>
    tpu.vector_store %arg14[%c0_13, %c0_14], %12 {strides = array<i32>} : memref<16x32xf32, #tpu.memory_space<vmem>>, vector<16x32xf32>,
    %c0_15 = arith.constant 0 : index
    %c0_16 = arith.constant 0 : index
    %14 = vector.load %arg15[%c0_15, %c0_16] : memref<16x32xf32, #tpu.memory_space<vmem>>, vector<16x32xf32>
    %c0_17 = arith.constant 0 : index
    %c0_18 = arith.constant 0 : index
    %15 = vector.load %arg6[%c0_17, %c0_18] : memref<32x32xf32, #tpu.memory_space<vmem>>, vector<32x32xf32>
    %cst_19 = arith.constant dense<0.000000e+00> : vector<16x32xf32>
    %16 = tpu.matmul %3, %15, %cst_19 {dimension_numbers = #tpu.dot_dimension_numbers<[1], [0], [0], [1], [0, 0, 1, 1], [], []>} : vector<16x32xf32>, vector<32x32xf32>, vector<16x32xf32> -> vector<16x32xf32>
    %17 = arith.addf %14, %16 : vector<16x32xf32>
    %c0_20 = arith.constant 0 : index
    %c0_21 = arith.constant 0 : index
    %18 = vector.load %arg15[%c0_20, %c0_21] : memref<16x32xf32, #tpu.memory_space<vmem>>, vector<16x32xf32>
    tpu.vector_store %arg15[%c0_20, %c0_21], %17 {strides = array<i32>} : memref<16x32xf32, #tpu.memory_space<vmem>>, vector<16x32xf32>,
    %c0_i32_22 = arith.constant 0 : i32
    %19 = arith.cmpi eq, %arg2, %c0_i32_22 : i32
    %20 = arith.extui %19 : i1 to i32
    %c0_i32_23 = arith.constant 0 : i32
    %21 = arith.cmpi ne, %20, %c0_i32_23 : i32
    scf.if %21 {
      %c0_24 = arith.constant 0 : index
      %c0_25 = arith.constant 0 : index
      %22 = vector.load %arg13[%c0_24, %c0_25] : memref<16x32xf32, #tpu.memory_space<vmem>>, vector<16x32xf32>
      %c0_26 = arith.constant 0 : index
      %c0_27 = arith.constant 0 : index
      %23 = vector.load %arg7[%c0_26, %c0_27] : memref<1x32xf32, #tpu.memory_space<vmem>>, vector<1x32xf32>
      %24 = vector.broadcast %23 : vector<1x32xf32> to vector<16x32xf32>
      %25 = arith.addf %22, %24 : vector<16x32xf32>
      %c0_28 = arith.constant 0 : index
      %c0_29 = arith.constant 0 : index
      %26 = vector.load %arg10[%c0_28, %c0_29] : memref<16x32xf32, #tpu.memory_space<vmem>>, vector<16x32xf32>
      tpu.vector_store %arg10[%c0_28, %c0_29], %25 {strides = array<i32>} : memref<16x32xf32, #tpu.memory_space<vmem>>, vector<16x32xf32>,
      %c0_30 = arith.constant 0 : index
      %c0_31 = arith.constant 0 : index
      %27 = vector.load %arg14[%c0_30, %c0_31] : memref<16x32xf32, #tpu.memory_space<vmem>>, vector<16x32xf32>
      %c0_32 = arith.constant 0 : index
      %c0_33 = arith.constant 0 : index
      %28 = vector.load %arg8[%c0_32, %c0_33] : memref<1x32xf32, #tpu.memory_space<vmem>>, vector<1x32xf32>
      %29 = vector.broadcast %28 : vector<1x32xf32> to vector<16x32xf32>
      %30 = arith.addf %27, %29 : vector<16x32xf32>
      %c0_34 = arith.constant 0 : index
      %c0_35 = arith.constant 0 : index
      %31 = vector.load %arg11[%c0_34, %c0_35] : memref<16x32xf32, #tpu.memory_space<vmem>>, vector<16x32xf32>
      tpu.vector_store %arg11[%c0_34, %c0_35], %30 {strides = array<i32>} : memref<16x32xf32, #tpu.memory_space<vmem>>, vector<16x32xf32>,
      %c0_36 = arith.constant 0 : index
      %c0_37 = arith.constant 0 : index
      %32 = vector.load %arg15[%c0_36, %c0_37] : memref<16x32xf32, #tpu.memory_space<vmem>>, vector<16x32xf32>
      %c0_38 = arith.constant 0 : index
      %c0_39 = arith.constant 0 : index
      %33 = vector.load %arg9[%c0_38, %c0_39] : memref<1x32xf32, #tpu.memory_space<vmem>>, vector<1x32xf32>
      %34 = vector.broadcast %33 : vector<1x32xf32> to vector<16x32xf32>
      %35 = arith.addf %32, %34 : vector<16x32xf32>
      %c0_40 = arith.constant 0 : index
      %c0_41 = arith.constant 0 : index
      %36 = vector.load %arg12[%c0_40, %c0_41] : memref<16x32xf32, #tpu.memory_space<vmem>>, vector<16x32xf32>
      tpu.vector_store %arg12[%c0_40, %c0_41], %35 {strides = array<i32>} : memref<16x32xf32, #tpu.memory_space<vmem>>, vector<16x32xf32>,
    } else {
    }
    return
  }
  func.func @transform_0(%arg0: i32, %arg1: i32, %arg2: i32) -> (i32, i32) {
    %c0_i32 = arith.constant 0 : i32
    return %arg0, %arg2 : i32, i32
  }
  func.func @transform_1(%arg0: i32, %arg1: i32, %arg2: i32) -> (i32, i32) {
    %c0_i32 = arith.constant 0 : i32
    return %arg2, %arg1 : i32, i32
  }
  func.func @transform_2(%arg0: i32, %arg1: i32, %arg2: i32) -> (i32, i32) {
    %c0_i32 = arith.constant 0 : i32
    return %arg2, %arg1 : i32, i32
  }
  func.func @transform_3(%arg0: i32, %arg1: i32, %arg2: i32) -> (i32, i32) {
    %c0_i32 = arith.constant 0 : i32
    return %arg2, %arg1 : i32, i32
  }
  func.func @transform_4(%arg0: i32, %arg1: i32, %arg2: i32) -> (i32, i32) {
    %c0_i32 = arith.constant 0 : i32
    %c0_i32_0 = arith.constant 0 : i32
    return %c0_i32, %arg1 : i32, i32
  }
  func.func @transform_5(%arg0: i32, %arg1: i32, %arg2: i32) -> (i32, i32) {
    %c0_i32 = arith.constant 0 : i32
    %c0_i32_0 = arith.constant 0 : i32
    return %c0_i32, %arg1 : i32, i32
  }
  func.func @transform_6(%arg0: i32, %arg1: i32, %arg2: i32) -> (i32, i32) {
    %c0_i32 = arith.constant 0 : i32
    %c0_i32_0 = arith.constant 0 : i32
    return %c0_i32, %arg1 : i32, i32
  }
  func.func @transform_7(%arg0: i32, %arg1: i32, %arg2: i32) -> (i32, i32) {
    %c0_i32 = arith.constant 0 : i32
    return %arg0, %arg1 : i32, i32
  }
  func.func @transform_8(%arg0: i32, %arg1: i32, %arg2: i32) -> (i32, i32) {
    %c0_i32 = arith.constant 0 : i32
    return %arg0, %arg1 : i32, i32
  }
  func.func @transform_9(%arg0: i32, %arg1: i32, %arg2: i32) -> (i32, i32) {
    %c0_i32 = arith.constant 0 : i32
    return %arg0, %arg1 : i32, i32
  }
}

</mosaic_0001>

<llo_original>
// kernel: tpu_custom_call.1
$region0: #{tpu_custom_call.1}
  #allocation0 [shape = 'u32[]', space=smem, size = 0x4, offset = 0x4, fixed_abs, tag = 'smem constant byte address 0x4 - core index']
  #allocation1 [shape = 'u32[144,128]{1,0:T(1,128)}', space=vmem, size = 0x12000, scoped, tag = 'internal scratch']
  #allocation2 [shape = 'f32[16,32]{1,0:T(8,128)}', space=vmem, size = 0x2000, scoped, tag = 'scratch operand']
  #allocation3 [shape = 'f32[16,32]{1,0:T(8,128)}', space=vmem, size = 0x2000, scoped, tag = 'scratch operand']
  #allocation4 [shape = 'f32[16,32]{1,0:T(8,128)}', space=vmem, size = 0x2000, scoped, tag = 'scratch operand']
  %s0 = inlined_call_operand.hbm [shape: f32[16,32], index: 0, kind: input, shape index: {}]
  %s1 = inlined_call_operand.hbm [shape: f32[32,32], index: 1, kind: input, shape index: {}]
  %s2 = inlined_call_operand.hbm [shape: f32[32,32], index: 2, kind: input, shape index: {}]
  %s3 = inlined_call_operand.hbm [shape: f32[32,32], index: 3, kind: input, shape index: {}]
  %s4 = inlined_call_operand.vmem [shape: f32[1,32], index: 4, kind: input, shape index: {}]
  %s5 = inlined_call_operand.vmem [shape: f32[1,32], index: 5, kind: input, shape index: {}]
  %s6 = inlined_call_operand.vmem [shape: f32[1,32], index: 6, kind: input, shape index: {}]
  %s7 = inlined_call_operand.hbm [shape: f32[16,32], index: 7, kind: output, shape index: {0}]
  %s8 = inlined_call_operand.hbm [shape: f32[16,32], index: 8, kind: output, shape index: {1}]
  %s9 = inlined_call_operand.hbm [shape: f32[16,32], index: 9, kind: output, shape index: {2}]
  %10 = xla_tuple %s7, %s8, %s9
  %s11 = sld [smem:[#allocation0]]
  $region78: #{tpu_custom_call.1} parent=0
    _
  %s13 = ssub.s32 1, %s11
  %s14 = scalar_select 0, %s13, %s11
  $region1: #{tpu_custom_call.1} parent=0
    #allocation5 [shape = 'u8[8192]{0}', space=vmem, size = 0x2000, scoped, tag = 'input window, operand 0, single buffered']
    #allocation6 [shape = 's32[1]{0}', space=sflag, size = 0x4, scoped, tag = 'scoped memory for tpu_custom_call.1']
    #allocation7 [shape = 's32[1]{0}', space=sflag, size = 0x4, scoped, tag = 'scoped memory for tpu_custom_call.1']
    #allocation8 [shape = 'u8[16384]{0}', space=vmem, size = 0x4000, scoped, tag = 'input window, operand 1, single buffered']
    #allocation9 [shape = 's32[1]{0}', space=sflag, size = 0x4, scoped, tag = 'scoped memory for tpu_custom_call.1']
    #allocation10 [shape = 'u8[16384]{0}', space=vmem, size = 0x4000, scoped, tag = 'input window, operand 2, single buffered']
    #allocation11 [shape = 'u8[16384]{0}', space=vmem, size = 0x4000, scoped, tag = 'input window, operand 3, single buffered']
    #allocation12 [shape = 's32[1]{0}', space=sflag, size = 0x4, scoped, tag = 'scoped memory for tpu_custom_call.1']
    #allocation13 [shape = 'u8[8192]{0}', space=vmem, size = 0x2000, scoped, tag = 'output window, operand 0, single buffered']
    #allocation14 [shape = 'u8[8192]{0}', space=vmem, size = 0x2000, scoped, tag = 'output window, operand 1, single buffered']
    #allocation15 [shape = 's32[1]{0}', space=sflag, size = 0x4, scoped, tag = 'scoped memory for tpu_custom_call.1']
    #allocation16 [shape = 'u8[8192]{0}', space=vmem, size = 0x2000, scoped, tag = 'output window, operand 2, single buffered']
    %15 = vsyncpa [#allocation6], 0
    %16 = vsyncpa [#allocation9], 0
    %17 = vsyncpa [#allocation12], 0
    %18 = vsyncpa [#allocation7], 0
    %19 = vsyncpa [#allocation15], 0
    // Predicated region
    $region2: #{tpu_custom_call.1} parent=1 // pred_check
      _
    $region3: #{tpu_custom_call.1} parent=1 // pred_check_branch
      %21 = sbr.rel (0) target = $region5
    $region4: #{tpu_custom_call.1} parent=1 // pred_region
      %s23 = ssub.s32 256, 256
      %24 = vsyncadd [#allocation6], %s23
      %s25 = sshll.u32 [#allocation5], 4
      %s26 = int_to_ptr.vmem [resolvable:$true] %s25
      %31 = dma.hbm_to_vmem [thread:$0]  %s0, 256, %s26, [#allocation6], 128, 128, 8
    $region5: #{tpu_custom_call.1} parent=1 // pred_fallthru
      _
    // Predicated region
    $region6: #{tpu_custom_call.1} parent=1 // pred_check
      _
    $region7: #{tpu_custom_call.1} parent=1 // pred_check_branch
      %33 = sbr.rel (0) target = $region9
    $region8: #{tpu_custom_call.1} parent=1 // pred_region
      %s35 = ssub.s32 512, 512
      %36 = vsyncadd [#allocation9], %s35
      %s37 = sshll.u32 [#allocation8], 4
      %s38 = int_to_ptr.vmem [resolvable:$true] %s37
      %43 = dma.hbm_to_vmem [thread:$0]  %s1, 512, %s38, [#allocation9], 128, 128, 8
    $region9: #{tpu_custom_call.1} parent=1 // pred_fallthru
      _
    // Predicated region
    $region10: #{tpu_custom_call.1} parent=1 // pred_check
      _
    $region11: #{tpu_custom_call.1} parent=1 // pred_check_branch
      %45 = sbr.rel (0) target = $region13
    $region12: #{tpu_custom_call.1} parent=1 // pred_region
      %s47 = ssub.s32 512, 512
      %48 = vsyncadd [#allocation9], %s47
      %s49 = sshll.u32 [#allocation10], 4
      %s50 = int_to_ptr.vmem [resolvable:$true] %s49
      %55 = dma.hbm_to_vmem [thread:$0]  %s2, 512, %s50, [#allocation9], 128, 128, 8
    $region13: #{tpu_custom_call.1} parent=1 // pred_fallthru
      _
    // Predicated region
    $region14: #{tpu_custom_call.1} parent=1 // pred_check
      _
    $region15: #{tpu_custom_call.1} parent=1 // pred_check_branch
      %57 = sbr.rel (0) target = $region17
    $region16: #{tpu_custom_call.1} parent=1 // pred_region
      %s59 = ssub.s32 512, 512
      %60 = vsyncadd [#allocation12], %s59
      %s61 = sshll.u32 [#allocation11], 4
      %s62 = int_to_ptr.vmem [resolvable:$true] %s61
      %67 = dma.hbm_to_vmem [thread:$0]  %s3, 512, %s62, [#allocation12], 128, 128, 8
    $region17: #{tpu_custom_call.1} parent=1 // pred_fallthru
      _
    // Predicated region
    $region18: #{tpu_custom_call.1} parent=1 // pred_check
      _
    $region19: #{tpu_custom_call.1} parent=1 // pred_check_branch
      %69 = sbr.rel (0) target = $region21
    $region20: #{tpu_custom_call.1} parent=1 // pred_region
      _
    $region21: #{tpu_custom_call.1} parent=1 // pred_fallthru
      _
    // Predicated region
    $region22: #{tpu_custom_call.1} parent=1 // pred_check
      _
    $region23: #{tpu_custom_call.1} parent=1 // pred_check_branch
      %71 = sbr.rel (0) target = $region25
    $region24: #{tpu_custom_call.1} parent=1 // pred_region
      _
    $region25: #{tpu_custom_call.1} parent=1 // pred_fallthru
      _
    // Predicated region
    $region26: #{tpu_custom_call.1} parent=1 // pred_check
      _
    $region27: #{tpu_custom_call.1} parent=1 // pred_check_branch
      %73 = sbr.rel (0) target = $region29
    $region28: #{tpu_custom_call.1} parent=1 // pred_region
      _
    $region29: #{tpu_custom_call.1} parent=1 // pred_fallthru
      _
    // Predicated region
    $region30: #{tpu_custom_call.1} parent=1 // pred_check
      _
    $region31: #{tpu_custom_call.1} parent=1 // pred_check_branch
      %75 = sbr.rel (0) target = $region33
    $region32: #{tpu_custom_call.1} parent=1 // pred_region
      %76 = dma.done [#allocation6], 256
    $region33: #{tpu_custom_call.1} parent=1 // pred_fallthru
      _
    // Predicated region
    $region34: #{tpu_custom_call.1} parent=1 // pred_check
      _
    $region35: #{tpu_custom_call.1} parent=1 // pred_check_branch
      %78 = sbr.rel (0) target = $region37
    $region36: #{tpu_custom_call.1} parent=1 // pred_region
      %79 = dma.done [#allocation9], 512
    $region37: #{tpu_custom_call.1} parent=1 // pred_fallthru
      _
    // Predicated region
    $region38: #{tpu_custom_call.1} parent=1 // pred_check
      _
    $region39: #{tpu_custom_call.1} parent=1 // pred_check_branch
      %81 = sbr.rel (0) target = $region41
    $region40: #{tpu_custom_call.1} parent=1 // pred_region
      %82 = dma.done [#allocation9], 512
    $region41: #{tpu_custom_call.1} parent=1 // pred_fallthru
      _
    // Predicated region
    $region42: #{tpu_custom_call.1} parent=1 // pred_check
      _
    $region43: #{tpu_custom_call.1} parent=1 // pred_check_branch
      %84 = sbr.rel (0) target = $region45
    $region44: #{tpu_custom_call.1} parent=1 // pred_region
      %85 = dma.done [#allocation12], 512
    $region45: #{tpu_custom_call.1} parent=1 // pred_fallthru
      _
    %p86 = scmp.eq.s32.totalorder 0, 0
    // Predicated region
    $region46: #{tpu_custom_call.1} parent=1 // pred_check
      %p87 = pneg %p86
    $region47: #{tpu_custom_call.1} parent=1 // pred_check_branch
      %89 = sbr.rel (%p87) target = $region49
    $region48: #{tpu_custom_call.1} parent=1 // pred_region
      %vm90 = vcmask 261120
      %91 = vst.msk [vmem:[#allocation2] sm:$0xff] %vm90, 0.0
      %92 = vst.msk [vmem:[#allocation2 + $0x8] sm:$0xff] %vm90, 0.0
      %93 = vst.msk [vmem:[#allocation3] sm:$0xff] %vm90, 0.0
      %94 = vst.msk [vmem:[#allocation3 + $0x8] sm:$0xff] %vm90, 0.0
      %95 = vst.msk [vmem:[#allocation4] sm:$0xff] %vm90, 0.0
      %96 = vst.msk [vmem:[#allocation4 + $0x8] sm:$0xff] %vm90, 0.0
    $region49: #{tpu_custom_call.1} parent=1 // pred_fallthru
      _
    %v97 = vld [vmem:[#allocation5] sm:$0xff]
    %v98 = vld [vmem:[#allocation5 + $0x8] sm:$0xff]
    %v99 = vld [vmem:[#allocation2] sm:$0xff]
    %v100 = vld [vmem:[#allocation2 + $0x8] sm:$0xff]
    %v101 = vld [vmem:[#allocation8] sm:$0xff]
    %v102 = vld [vmem:[#allocation8 + $0x8] sm:$0xff]
    %v103 = vld [vmem:[#allocation8 + $0x10] sm:$0xff]
    %v104 = vld [vmem:[#allocation8 + $0x18] sm:$0xff]
    %vm105 = vcmask 261120
    %v107 = vsel %vm105, %v97, 0
    %v110 = vsel %vm105, %v98, 0
    %112 = vmatprep.subr.mxu0 0.0
    %113 = vmatpush1.msra.mxu0 0.0
    %114 = vmatprep.subr.mxu0 0.0
    %115 = vmatpush1.msra.mxu0 0.0
    %116 = vmatprep.subr.mxu0 0.0
    %117 = vmatpush1.msra.mxu0 0.0
    %118 = vmatprep.subr.mxu0 0.0
    %119 = vmatpush1.msra.mxu0 0.0
    %120 = vmatprep.subr.mxu0 0.0
    %121 = vmatpush1.msra.mxu0 0.0
    %122 = vmatprep.subr.mxu0 0.0
    %123 = vmatpush1.msra.mxu0 0.0
    %124 = vmatprep.subr.mxu0 0.0
    %125 = vmatpush1.msra.mxu0 0.0
    %126 = vmatprep.subr.mxu0 0.0
    %127 = vmatpush1.msra.mxu0 0.0
    %128 = vmatprep.subr.mxu0 0.0
    %129 = vmatpush1.msra.mxu0 0.0
    %130 = vmatprep.subr.mxu0 0.0
    %131 = vmatpush1.msra.mxu0 0.0
    %132 = vmatprep.subr.mxu0 0.0
    %133 = vmatpush1.msra.mxu0 0.0
    %134 = vmatprep.subr.mxu0 0.0
    %135 = vmatpush1.msra.mxu0 0.0
    %136 = vmatprep.subr.mxu0 0.0
    %137 = vmatpush1.msra.mxu0 %v104
    %138 = vmatprep.subr.mxu0 0.0
    %139 = vmatpush1.msra.mxu0 %v103
    %140 = vmatprep.subr.mxu0 0.0
    %141 = vmatpush1.msra.mxu0 %v102
    %142 = vmatprep.subr.mxu0 0.0
    %143 = vmatpush1.msra.mxu0 %v101
    %144 = vmatprep.subr.mxu0 0.0
    %145 = vmatpush2.msra.mxu0 0.0
    %146 = vmatprep.subr.mxu0 0.0
    %147 = vmatpush2.msra.mxu0 0.0
    %148 = vmatprep.subr.mxu0 0.0
    %149 = vmatpush2.msra.mxu0 0.0
    %150 = vmatprep.subr.mxu0 0.0
    %151 = vmatpush2.msra.mxu0 0.0
    %152 = vmatprep.subr.mxu0 0.0
    %153 = vmatpush2.msra.mxu0 0.0
    %154 = vmatprep.subr.mxu0 0.0
    %155 = vmatpush2.msra.mxu0 0.0
    %156 = vmatprep.subr.mxu0 0.0
    %157 = vmatpush2.msra.mxu0 0.0
    %158 = vmatprep.subr.mxu0 0.0
    %159 = vmatpush2.msra.mxu0 0.0
    %160 = vmatprep.subr.mxu0 0.0
    %161 = vmatpush2.msra.mxu0 0.0
    %162 = vmatprep.subr.mxu0 0.0
    %163 = vmatpush2.msra.mxu0 0.0
    %164 = vmatprep.subr.mxu0 0.0
    %165 = vmatpush2.msra.mxu0 0.0
    %166 = vmatprep.subr.mxu0 0.0
    %167 = vmatpush2.msra.mxu0 0.0
    %168 = vmatprep.subr.mxu0 0.0
    %169 = vmatpush2.msra.mxu0 0.0
    %170 = vmatprep.subr.mxu0 0.0
    %171 = vmatpush2.msra.mxu0 0.0
    %172 = vmatprep.subr.mxu0 0.0
    %173 = vmatpush2.msra.mxu0 0.0
    %174 = vmatprep.subr.mxu0 0.0
    %175 = vmatpush2.msra.mxu0 0.0
    %176 = vmatprep.mubr.f32.mxu0 0.0
    %177 = vmatmul.mubr.f32.gmra.mxu0 %v107
    %v178 = vpop.f32.mrf.mxu0
    %v179 = vadd.f32 0.0, %v178
    %v180 = vpop.f32.mrf.mxu0
    %181 = vmatprep.mubr.f32.mxu0 0.0
    %182 = vmatmul.mubr.f32.gmra.mxu0 %v110
    %v183 = vpop.f32.mrf.mxu0
    %v184 = vadd.f32 0.0, %v183
    %v185 = vpop.f32.mrf.mxu0
    %186 = vdwg.mxu0
    %v187 = vadd.f32 %v99, %v179
    %v188 = vadd.f32 %v100, %v184
    %189 = vst.msk [vmem:[#allocation2] sm:$0xff] %vm105, %v187
    %190 = vst.msk [vmem:[#allocation2 + $0x8] sm:$0xff] %vm105, %v188
    %v191 = vld [vmem:[#allocation3] sm:$0xff]
    %v192 = vld [vmem:[#allocation3 + $0x8] sm:$0xff]
    %v193 = vld [vmem:[#allocation10] sm:$0xff]
    %v194 = vld [vmem:[#allocation10 + $0x8] sm:$0xff]
    %v195 = vld [vmem:[#allocation10 + $0x10] sm:$0xff]
    %v196 = vld [vmem:[#allocation10 + $0x18] sm:$0xff]
    %197 = vmatprep.subr.mxu0 0.0
    %198 = vmatpush1.msra.mxu0 0.0
    %199 = vmatprep.subr.mxu0 0.0
    %200 = vmatpush1.msra.mxu0 0.0
    %201 = vmatprep.subr.mxu0 0.0
    %202 = vmatpush1.msra.mxu0 0.0
    %203 = vmatprep.subr.mxu0 0.0
    %204 = vmatpush1.msra.mxu0 0.0
    %205 = vmatprep.subr.mxu0 0.0
    %206 = vmatpush1.msra.mxu0 0.0
    %207 = vmatprep.subr.mxu0 0.0
    %208 = vmatpush1.msra.mxu0 0.0
    %209 = vmatprep.subr.mxu0 0.0
    %210 = vmatpush1.msra.mxu0 0.0
    %211 = vmatprep.subr.mxu0 0.0
    %212 = vmatpush1.msra.mxu0 0.0
    %213 = vmatprep.subr.mxu0 0.0
    %214 = vmatpush1.msra.mxu0 0.0
    %215 = vmatprep.subr.mxu0 0.0
    %216 = vmatpush1.msra.mxu0 0.0
    %217 = vmatprep.subr.mxu0 0.0
    %218 = vmatpush1.msra.mxu0 0.0
    %219 = vmatprep.subr.mxu0 0.0
    %220 = vmatpush1.msra.mxu0 0.0
    %221 = vmatprep.subr.mxu0 0.0
    %222 = vmatpush1.msra.mxu0 %v196
    %223 = vmatprep.subr.mxu0 0.0
    %224 = vmatpush1.msra.mxu0 %v195
    %225 = vmatprep.subr.mxu0 0.0
    %226 = vmatpush1.msra.mxu0 %v194
    %227 = vmatprep.subr.mxu0 0.0
    %228 = vmatpush1.msra.mxu0 %v193
    %229 = vmatprep.subr.mxu0 0.0
    %230 = vmatpush2.msra.mxu0 0.0
    %231 = vmatprep.subr.mxu0 0.0
    %232 = vmatpush2.msra.mxu0 0.0
    %233 = vmatprep.subr.mxu0 0.0
    %234 = vmatpush2.msra.mxu0 0.0
    %235 = vmatprep.subr.mxu0 0.0
    %236 = vmatpush2.msra.mxu0 0.0
    %237 = vmatprep.subr.mxu0 0.0
    %238 = vmatpush2.msra.mxu0 0.0
    %239 = vmatprep.subr.mxu0 0.0
    %240 = vmatpush2.msra.mxu0 0.0
    %241 = vmatprep.subr.mxu0 0.0
    %242 = vmatpush2.msra.mxu0 0.0
    %243 = vmatprep.subr.mxu0 0.0
    %244 = vmatpush2.msra.mxu0 0.0
    %245 = vmatprep.subr.mxu0 0.0
    %246 = vmatpush2.msra.mxu0 0.0
    %247 = vmatprep.subr.mxu0 0.0
    %248 = vmatpush2.msra.mxu0 0.0
    %249 = vmatprep.subr.mxu0 0.0
    %250 = vmatpush2.msra.mxu0 0.0
    %251 = vmatprep.subr.mxu0 0.0
    %252 = vmatpush2.msra.mxu0 0.0
    %253 = vmatprep.subr.mxu0 0.0
    %254 = vmatpush2.msra.mxu0 0.0
    %255 = vmatprep.subr.mxu0 0.0
    %256 = vmatpush2.msra.mxu0 0.0
    %257 = vmatprep.subr.mxu0 0.0
    %258 = vmatpush2.msra.mxu0 0.0
    %259 = vmatprep.subr.mxu0 0.0
    %260 = vmatpush2.msra.mxu0 0.0
    %261 = vmatprep.mubr.f32.mxu0 0.0
    %262 = vmatmul.mubr.f32.gmra.mxu0 %v107
    %v263 = vpop.f32.mrf.mxu0
    %v264 = vadd.f32 0.0, %v263
    %v265 = vpop.f32.mrf.mxu0
    %266 = vmatprep.mubr.f32.mxu0 0.0
    %267 = vmatmul.mubr.f32.gmra.mxu0 %v110
    %v268 = vpop.f32.mrf.mxu0
    %v269 = vadd.f32 0.0, %v268
    %v270 = vpop.f32.mrf.mxu0
    %271 = vdwg.mxu0
    %v272 = vadd.f32 %v191, %v264
    %v273 = vadd.f32 %v192, %v269
    %274 = vst.msk [vmem:[#allocation3] sm:$0xff] %vm105, %v272
    %275 = vst.msk [vmem:[#allocation3 + $0x8] sm:$0xff] %vm105, %v273
    %v276 = vld [vmem:[#allocation4] sm:$0xff]
    %v277 = vld [vmem:[#allocation4 + $0x8] sm:$0xff]
    %v278 = vld [vmem:[#allocation11] sm:$0xff]
    %v279 = vld [vmem:[#allocation11 + $0x8] sm:$0xff]
    %v280 = vld [vmem:[#allocation11 + $0x10] sm:$0xff]
    %v281 = vld [vmem:[#allocation11 + $0x18] sm:$0xff]
    %282 = vmatprep.subr.mxu0 0.0
    %283 = vmatpush1.msra.mxu0 0.0
    %284 = vmatprep.subr.mxu0 0.0
    %285 = vmatpush1.msra.mxu0 0.0
    %286 = vmatprep.subr.mxu0 0.0
    %287 = vmatpush1.msra.mxu0 0.0
    %288 = vmatprep.subr.mxu0 0.0
    %289 = vmatpush1.msra.mxu0 0.0
    %290 = vmatprep.subr.mxu0 0.0
    %291 = vmatpush1.msra.mxu0 0.0
    %292 = vmatprep.subr.mxu0 0.0
    %293 = vmatpush1.msra.mxu0 0.0
    %294 = vmatprep.subr.mxu0 0.0
    %295 = vmatpush1.msra.mxu0 0.0
    %296 = vmatprep.subr.mxu0 0.0
    %297 = vmatpush1.msra.mxu0 0.0
    %298 = vmatprep.subr.mxu0 0.0
    %299 = vmatpush1.msra.mxu0 0.0
    %300 = vmatprep.subr.mxu0 0.0
    %301 = vmatpush1.msra.mxu0 0.0
    %302 = vmatprep.subr.mxu0 0.0
    %303 = vmatpush1.msra.mxu0 0.0
    %304 = vmatprep.subr.mxu0 0.0
    %305 = vmatpush1.msra.mxu0 0.0
    %306 = vmatprep.subr.mxu0 0.0
    %307 = vmatpush1.msra.mxu0 %v281
    %308 = vmatprep.subr.mxu0 0.0
    %309 = vmatpush1.msra.mxu0 %v280
    %310 = vmatprep.subr.mxu0 0.0
    %311 = vmatpush1.msra.mxu0 %v279
    %312 = vmatprep.subr.mxu0 0.0
    %313 = vmatpush1.msra.mxu0 %v278
    %314 = vmatprep.subr.mxu0 0.0
    %315 = vmatpush2.msra.mxu0 0.0
    %316 = vmatprep.subr.mxu0 0.0
    %317 = vmatpush2.msra.mxu0 0.0
    %318 = vmatprep.subr.mxu0 0.0
    %319 = vmatpush2.msra.mxu0 0.0
    %320 = vmatprep.subr.mxu0 0.0
    %321 = vmatpush2.msra.mxu0 0.0
    %322 = vmatprep.subr.mxu0 0.0
    %323 = vmatpush2.msra.mxu0 0.0
    %324 = vmatprep.subr.mxu0 0.0
    %325 = vmatpush2.msra.mxu0 0.0
    %326 = vmatprep.subr.mxu0 0.0
    %327 = vmatpush2.msra.mxu0 0.0
    %328 = vmatprep.subr.mxu0 0.0
    %329 = vmatpush2.msra.mxu0 0.0
    %330 = vmatprep.subr.mxu0 0.0
    %331 = vmatpush2.msra.mxu0 0.0
    %332 = vmatprep.subr.mxu0 0.0
    %333 = vmatpush2.msra.mxu0 0.0
    %334 = vmatprep.subr.mxu0 0.0
    %335 = vmatpush2.msra.mxu0 0.0
    %336 = vmatprep.subr.mxu0 0.0
    %337 = vmatpush2.msra.mxu0 0.0
    %338 = vmatprep.subr.mxu0 0.0
    %339 = vmatpush2.msra.mxu0 0.0
    %340 = vmatprep.subr.mxu0 0.0
    %341 = vmatpush2.msra.mxu0 0.0
    %342 = vmatprep.subr.mxu0 0.0
    %343 = vmatpush2.msra.mxu0 0.0
    %344 = vmatprep.subr.mxu0 0.0
    %345 = vmatpush2.msra.mxu0 0.0
    %346 = vmatprep.mubr.f32.mxu0 0.0
    %347 = vmatmul.mubr.f32.gmra.mxu0 %v107
    %v348 = vpop.f32.mrf.mxu0
    %v349 = vadd.f32 0.0, %v348
    %v350 = vpop.f32.mrf.mxu0
    %351 = vmatprep.mubr.f32.mxu0 0.0
    %352 = vmatmul.mubr.f32.gmra.mxu0 %v110
    %v353 = vpop.f32.mrf.mxu0
    %v354 = vadd.f32 0.0, %v353
    %v355 = vpop.f32.mrf.mxu0
    %356 = vdwg.mxu0
    %v357 = vadd.f32 %v276, %v349
    %v358 = vadd.f32 %v277, %v354
    %359 = vst.msk [vmem:[#allocation4] sm:$0xff] %vm105, %v357
    %360 = vst.msk [vmem:[#allocation4 + $0x8] sm:$0xff] %vm105, %v358
    // Predicated region
    $region50: #{tpu_custom_call.1} parent=1 // pred_check
      %p361 = pneg %p86
    $region51: #{tpu_custom_call.1} parent=1 // pred_check_branch
      %363 = sbr.rel (%p361) target = $region53
    $region52: #{tpu_custom_call.1} parent=1 // pred_region
      %v364 = vld [vmem:[#allocation2] sm:$0xff]
      %v365 = vld [vmem:[#allocation2 + $0x8] sm:$0xff]
      %v366 = vld [vmem:[%s4] sm:$0x1]
      %v368 = vlaneseq
      %v369 = vshrl.u32 %v368, 7
      %v370 = vsub.s32 0, %v369
      %v371 = vrot.slane %v366, %v370
      %v373 = vadd.f32 %v364, %v371
      %v374 = vadd.f32 %v365, %v371
      %375 = vst.msk [vmem:[#allocation13] sm:$0xff] %vm105, %v373
      %376 = vst.msk [vmem:[#allocation13 + $0x8] sm:$0xff] %vm105, %v374
      %v377 = vld [vmem:[#allocation3] sm:$0xff]
      %v378 = vld [vmem:[#allocation3 + $0x8] sm:$0xff]
      %v379 = vld [vmem:[%s5] sm:$0x1]
      %v381 = vlaneseq
      %v382 = vshrl.u32 %v381, 7
      %v383 = vsub.s32 0, %v382
      %v384 = vrot.slane %v379, %v383
      %v386 = vadd.f32 %v377, %v384
      %v387 = vadd.f32 %v378, %v384
      %388 = vst.msk [vmem:[#allocation14] sm:$0xff] %vm105, %v386
      %389 = vst.msk [vmem:[#allocation14 + $0x8] sm:$0xff] %vm105, %v387
      %v390 = vld [vmem:[#allocation4] sm:$0xff]
      %v391 = vld [vmem:[#allocation4 + $0x8] sm:$0xff]
      %v392 = vld [vmem:[%s6] sm:$0x1]
      %v394 = vlaneseq
      %v395 = vshrl.u32 %v394, 7
      %v396 = vsub.s32 0, %v395
      %v397 = vrot.slane %v392, %v396
      %v399 = vadd.f32 %v390, %v397
      %v400 = vadd.f32 %v391, %v397
      %401 = vst.msk [vmem:[#allocation16] sm:$0xff] %vm105, %v399
      %402 = vst.msk [vmem:[#allocation16 + $0x8] sm:$0xff] %vm105, %v400
    $region53: #{tpu_custom_call.1} parent=1 // pred_fallthru
      _
    // Predicated region
    $region54: #{tpu_custom_call.1} parent=1 // pred_check
      _
    $region55: #{tpu_custom_call.1} parent=1 // pred_check_branch
      %404 = sbr.rel (0) target = $region57
    $region56: #{tpu_custom_call.1} parent=1 // pred_region
      %s406 = ssub.s32 256, 256
      %407 = vsyncadd [#allocation7], %s406
      %s408 = sshll.u32 [#allocation13], 4
      %s409 = int_to_ptr.vmem [resolvable:$true] %s408
      %414 = dma.vmem_to_hbm [thread:$0]  %s409, 256, %s7, [#allocation7], 128, 128, 8
    $region57: #{tpu_custom_call.1} parent=1 // pred_fallthru
      _
    // Predicated region
    $region58: #{tpu_custom_call.1} parent=1 // pred_check
      _
    $region59: #{tpu_custom_call.1} parent=1 // pred_check_branch
      %416 = sbr.rel (0) target = $region61
    $region60: #{tpu_custom_call.1} parent=1 // pred_region
      %s418 = ssub.s32 256, 256
      %419 = vsyncadd [#allocation15], %s418
      %s420 = sshll.u32 [#allocation14], 4
      %s421 = int_to_ptr.vmem [resolvable:$true] %s420
      %426 = dma.vmem_to_hbm [thread:$0]  %s421, 256, %s8, [#allocation15], 128, 128, 8
    $region61: #{tpu_custom_call.1} parent=1 // pred_fallthru
      _
    // Predicated region
    $region62: #{tpu_custom_call.1} parent=1 // pred_check
      _
    $region63: #{tpu_custom_call.1} parent=1 // pred_check_branch
      %428 = sbr.rel (0) target = $region65
    $region64: #{tpu_custom_call.1} parent=1 // pred_region
      %s430 = ssub.s32 256, 256
      %431 = vsyncadd [#allocation15], %s430
      %s432 = sshll.u32 [#allocation16], 4
      %s433 = int_to_ptr.vmem [resolvable:$true] %s432
      %438 = dma.vmem_to_hbm [thread:$0]  %s433, 256, %s9, [#allocation15], 128, 128, 8
    $region65: #{tpu_custom_call.1} parent=1 // pred_fallthru
      _
    // Predicated region
    $region66: #{tpu_custom_call.1} parent=1 // pred_check
      _
    $region67: #{tpu_custom_call.1} parent=1 // pred_check_branch
      %440 = sbr.rel (0) target = $region69
    $region68: #{tpu_custom_call.1} parent=1 // pred_region
      %441 = dma.done [#allocation7], 256
    $region69: #{tpu_custom_call.1} parent=1 // pred_fallthru
      _
    // Predicated region
    $region70: #{tpu_custom_call.1} parent=1 // pred_check
      _
    $region71: #{tpu_custom_call.1} parent=1 // pred_check_branch
      %443 = sbr.rel (0) target = $region73
    $region72: #{tpu_custom_call.1} parent=1 // pred_region
      %444 = dma.done [#allocation15], 256
    $region73: #{tpu_custom_call.1} parent=1 // pred_fallthru
      _
    // Predicated region
    $region74: #{tpu_custom_call.1} parent=1 // pred_check
      _
    $region75: #{tpu_custom_call.1} parent=1 // pred_check_branch
      %446 = sbr.rel (0) target = $region77
    $region76: #{tpu_custom_call.1} parent=1 // pred_region
      %447 = dma.done [#allocation15], 256
    $region77: #{tpu_custom_call.1} parent=1 // pred_fallthru
      _
    %448 = vsyncpa [#allocation6], 1
    %449 = vsyncpa [#allocation9], 1
    %450 = vsyncpa [#allocation12], 1
    %451 = vsyncpa [#allocation7], 1
    %452 = vsyncpa [#allocation15], 1

</llo_original>
